<compile_context>
chip_gen: v5e
topology: v5e:2x2
jax: 0.10.0
libtpu: 0.0.40
codegen_flags: <defaults>
</compile_context>

<pallas_src>
import functools
import math

import jax
import jax.numpy as jnp
from jax.experimental import pallas as pl
from jax.experimental.pallas import tpu as pltpu


def _round_up(x: int, n: int) -> int:
    return ((x + n - 1) // n) * n


def _approx_gelu_kernel(x_ref, w_ref, b_ref, o_ref, acc_ref):
    k = pl.program_id(2)

    @pl.when(k == 0)
    def _init():
        acc_ref[...] = jnp.zeros_like(acc_ref)

    # MXU matmul with f32 accumulation (operands may be bf16 or f32).
    acc_ref[...] += jnp.dot(
        x_ref[...], w_ref[...], preferred_element_type=jnp.float32
    )

    # Epilogue only on the final K step: bias add + x*sigmoid(1.702*x), all f32,
    # cast to the output dtype only at the store.
    @pl.when(k == pl.num_programs(2) - 1)
    def _epilogue():
        y = acc_ref[...] + b_ref[...].astype(jnp.float32)
        o_ref[...] = (y * jax.nn.sigmoid(1.702 * y)).astype(o_ref.dtype)


@functools.partial(
    jax.jit, static_argnames=("block_m", "block_n", "block_k", "use_bf16")
)
def approximate_gelu(x, weight, bias, *, block_m=512, block_n=256, block_k=512,
                     use_bf16=False):
    """x: [..., dim_in]; weight: [dim_in, dim_out]; bias: [dim_out]."""
    orig_dtype = x.dtype
    dim_in = x.shape[-1]
    dim_out = weight.shape[-1]
    lead = x.shape[:-1]
    m = int(math.prod(lead)) if lead else 1

    if use_bf16:
        # bf16 MXU operands (v5e/v6e/v7x fast path); accumulation stays f32.
        x = x.astype(jnp.bfloat16)
        weight = weight.astype(jnp.bfloat16)

    x2d = x.reshape(m, dim_in)
    b2d = bias.reshape(1, dim_out).astype(jnp.float32)

    # Tile sizes: clamp to the (aligned) problem size; keep TPU layout
    # alignment (sublane=8 on second-to-last dim, lane=128 on last dim).
    tm = min(block_m, _round_up(m, 8))
    tn = min(block_n, _round_up(dim_out, 128))
    tk = min(block_k, _round_up(dim_in, 128))

    m_pad = _round_up(m, tm)
    n_pad = _round_up(dim_out, tn)
    k_pad = _round_up(dim_in, tk)

    if (m_pad, k_pad) != (m, dim_in):
        x2d = jnp.pad(x2d, ((0, m_pad - m), (0, k_pad - dim_in)))
    w2d = weight
    if (k_pad, n_pad) != (dim_in, dim_out):
        w2d = jnp.pad(w2d, ((0, k_pad - dim_in), (0, n_pad - dim_out)))
    if n_pad != dim_out:
        b2d = jnp.pad(b2d, ((0, 0), (0, n_pad - dim_out)))

    grid = (m_pad // tm, n_pad // tn, k_pad // tk)

    in_elem = jnp.dtype(x2d.dtype).itemsize
    out_elem = jnp.dtype(orig_dtype).itemsize
    # double-buffered x/w/out tiles + bias tile + f32 accumulator scratch
    vmem_need = (
        2 * (tm * tk + tk * tn) * in_elem
        + 2 * tm * tn * out_elem
        + 2 * tn * 4
        + tm * tn * 4
    )
    vmem_limit = int(min(max(2 * vmem_need, 16 << 20), 64 << 20))

    cost = pl.CostEstimate(
        flops=2 * m * dim_in * dim_out,
        transcendentals=m * dim_out,
        bytes_accessed=(
            m * dim_in * in_elem
            + dim_in * dim_out * in_elem
            + dim_out * 4
            + m * dim_out * out_elem
        ),
    )

    out = pl.pallas_call(
        _approx_gelu_kernel,
        out_shape=jax.ShapeDtypeStruct((m_pad, n_pad), orig_dtype),
        grid_spec=pltpu.PrefetchScalarGridSpec(
            num_scalar_prefetch=0,
            grid=grid,
            in_specs=[
                pl.BlockSpec((tm, tk), lambda i, j, k: (i, k)),
                pl.BlockSpec((tk, tn), lambda i, j, k: (k, j)),
                pl.BlockSpec((1, tn), lambda i, j, k: (0, j)),
            ],
            out_specs=pl.BlockSpec((tm, tn), lambda i, j, k: (i, j)),
            scratch_shapes=[pltpu.VMEM((tm, tn), jnp.float32)],
        ),
        compiler_params=pltpu.CompilerParams(
            dimension_semantics=("parallel", "parallel", "arbitrary"),
            vmem_limit_bytes=vmem_limit,
        ),
        cost_estimate=cost,
    )(x2d, w2d, b2d)

    out = out[:m, :dim_out]
    return out.reshape(*lead, dim_out)


def reference(x, weight, bias):
    y = jnp.einsum("...i,io->...o", x, weight) + bias
    return y * jax.nn.sigmoid(1.702 * y)


if __name__ == "__main__":
    batch, seq, dim_in, dim_out = 2, 8, 32, 32

    key = jax.random.PRNGKey(0)
    kx, kw, kb = jax.random.split(key, 3)

    # Deterministic init (nn.Linear shapes: W [out,in], b [out]); weight stored
    # transposed as [in, out] for the row-major TPU matmul.
    bound = 1.0 / math.sqrt(dim_in)
    w_t = jax.random.uniform(kw, (dim_in, dim_out), jnp.float32, -bound, bound)
    b = jax.random.uniform(kb, (dim_out,), jnp.float32, -bound, bound)
    x = jax.random.normal(kx, (batch, seq, dim_in), jnp.float32)

    # f32 path (exact vs f32 reference).
    out = jax.block_until_ready(approximate_gelu(x, w_t, b))
    ref = reference(x, w_t, b)
    assert out.shape == (batch, seq, dim_out)
    assert jnp.allclose(out, ref, atol=1e-5, rtol=1e-5)

    # bf16-MXU-operand path (f32 accumulate + f32 epilogue), looser tolerance.
    out_bf16 = jax.block_until_ready(approximate_gelu(x, w_t, b, use_bf16=True))
    ref_bf16 = reference(
        x.astype(jnp.bfloat16).astype(jnp.float32),
        w_t.astype(jnp.bfloat16).astype(jnp.float32),
        b,
    )
    assert jnp.allclose(out_bf16, ref_bf16, atol=1e-2, rtol=1e-2)

    print("KERNEL_OK")
</pallas_src>

<mosaic_0001>
module attributes {stable_mosaic.version = 11 : i64} {
  func.func @_approx_gelu_kernel(%arg0: i32, %arg1: i32, %arg2: i32, %arg3: memref<16x128xf32, #tpu.memory_space<vmem>>, %arg4: memref<128x128xf32, #tpu.memory_space<vmem>>, %arg5: memref<1x128xf32, #tpu.memory_space<vmem>>, %arg6: memref<16x128xf32, #tpu.memory_space<vmem>>, %arg7: memref<16x128xf32, #tpu.memory_space<vmem>>) attributes {dimension_semantics = [#tpu.dimension_semantics<parallel>, #tpu.dimension_semantics<parallel>, #tpu.dimension_semantics<arbitrary>], iteration_bounds = array<i64: 1, 1, 1>, scalar_prefetch = 0 : i64, scratch_operands = 1 : i64, tpu.core_type = #tpu.core_type<tc>, window_params = [{transform_indices = @transform_0, window_bounds = array<i64: 16, 128>}, {transform_indices = @transform_1, window_bounds = array<i64: 128, 128>}, {transform_indices = @transform_2, window_bounds = array<i64: 1, 128>}, {transform_indices = @transform_3, window_bounds = array<i64: 16, 128>}]} {
    %c0_i32 = arith.constant 0 : i32
    %0 = arith.cmpi eq, %arg2, %c0_i32 : i32
    %1 = arith.extui %0 : i1 to i32
    %c0_i32_0 = arith.constant 0 : i32
    %2 = arith.cmpi ne, %1, %c0_i32_0 : i32
    scf.if %2 {
      %cst_10 = arith.constant 0.000000e+00 : f32
      %12 = vector.broadcast %cst_10 : f32 to vector<16x128xf32>
      %c0_11 = arith.constant 0 : index
      %c0_12 = arith.constant 0 : index
      %13 = vector.load %arg7[%c0_11, %c0_12] : memref<16x128xf32, #tpu.memory_space<vmem>>, vector<16x128xf32>
      tpu.vector_store %arg7[%c0_11, %c0_12], %12 {strides = array<i32>} : memref<16x128xf32, #tpu.memory_space<vmem>>, vector<16x128xf32>,
    } else {
    }
    %c0 = arith.constant 0 : index
    %c0_1 = arith.constant 0 : index
    %3 = vector.load %arg7[%c0, %c0_1] : memref<16x128xf32, #tpu.memory_space<vmem>>, vector<16x128xf32>
    %c0_2 = arith.constant 0 : index
    %c0_3 = arith.constant 0 : index
    %4 = vector.load %arg3[%c0_2, %c0_3] : memref<16x128xf32, #tpu.memory_space<vmem>>, vector<16x128xf32>
    %c0_4 = arith.constant 0 : index
    %c0_5 = arith.constant 0 : index
    %5 = vector.load %arg4[%c0_4, %c0_5] : memref<128x128xf32, #tpu.memory_space<vmem>>, vector<128x128xf32>
    %cst = arith.constant dense<0.000000e+00> : vector<16x128xf32>
    %6 = tpu.matmul %4, %5, %cst {dimension_numbers = #tpu.dot_dimension_numbers<[1], [0], [0], [1], [0, 0, 1, 1], [], []>} : vector<16x128xf32>, vector<128x128xf32>, vector<16x128xf32> -> vector<16x128xf32>
    %7 = arith.addf %3, %6 : vector<16x128xf32>
    %c0_6 = arith.constant 0 : index
    %c0_7 = arith.constant 0 : index
    %8 = vector.load %arg7[%c0_6, %c0_7] : memref<16x128xf32, #tpu.memory_space<vmem>>, vector<16x128xf32>
    tpu.vector_store %arg7[%c0_6, %c0_7], %7 {strides = array<i32>} : memref<16x128xf32, #tpu.memory_space<vmem>>, vector<16x128xf32>,
    %c0_i32_8 = arith.constant 0 : i32
    %9 = arith.cmpi eq, %arg2, %c0_i32_8 : i32
    %10 = arith.extui %9 : i1 to i32
    %c0_i32_9 = arith.constant 0 : i32
    %11 = arith.cmpi ne, %10, %c0_i32_9 : i32
    scf.if %11 {
      %c0_10 = arith.constant 0 : index
      %c0_11 = arith.constant 0 : index
      %12 = vector.load %arg7[%c0_10, %c0_11] : memref<16x128xf32, #tpu.memory_space<vmem>>, vector<16x128xf32>
      %c0_12 = arith.constant 0 : index
      %c0_13 = arith.constant 0 : index
      %13 = vector.load %arg5[%c0_12, %c0_13] : memref<1x128xf32, #tpu.memory_space<vmem>>, vector<1x128xf32>
      %14 = vector.broadcast %13 : vector<1x128xf32> to vector<16x128xf32>
      %15 = arith.addf %12, %14 : vector<16x128xf32>
      %cst_14 = arith.constant 1.702000e+00 : f32
      %16 = vector.broadcast %cst_14 : f32 to vector<16x128xf32>
      %17 = arith.mulf %16, %15 : vector<16x128xf32>
      %18 = arith.negf %17 : vector<16x128xf32>
      %19 = math.exp %18 : vector<16x128xf32>
      %cst_15 = arith.constant 1.000000e+00 : f32
      %20 = vector.broadcast %cst_15 : f32 to vector<16x128xf32>
      %21 = arith.addf %20, %19 : vector<16x128xf32>
      %22 = arith.divf %20, %21 : vector<16x128xf32>
      %23 = arith.mulf %15, %22 : vector<16x128xf32>
      %c0_16 = arith.constant 0 : index
      %c0_17 = arith.constant 0 : index
      %24 = vector.load %arg6[%c0_16, %c0_17] : memref<16x128xf32, #tpu.memory_space<vmem>>, vector<16x128xf32>
      tpu.vector_store %arg6[%c0_16, %c0_17], %23 {strides = array<i32>} : memref<16x128xf32, #tpu.memory_space<vmem>>, vector<16x128xf32>,
    } else {
    }
    return
  }
  func.func @transform_0(%arg0: i32, %arg1: i32, %arg2: i32) -> (i32, i32) {
    %c0_i32 = arith.constant 0 : i32
    return %arg0, %arg2 : i32, i32
  }
  func.func @transform_1(%arg0: i32, %arg1: i32, %arg2: i32) -> (i32, i32) {
    %c0_i32 = arith.constant 0 : i32
    return %arg2, %arg1 : i32, i32
  }
  func.func @transform_2(%arg0: i32, %arg1: i32, %arg2: i32) -> (i32, i32) {
    %c0_i32 = arith.constant 0 : i32
    %c0_i32_0 = arith.constant 0 : i32
    return %c0_i32, %arg1 : i32, i32
  }
  func.func @transform_3(%arg0: i32, %arg1: i32, %arg2: i32) -> (i32, i32) {
    %c0_i32 = arith.constant 0 : i32
    return %arg0, %arg1 : i32, i32
  }
}

</mosaic_0001>

<llo_original>
// kernel: approximate_gelu.1
$region0: #{approximate_gelu.1}
  #allocation0 [shape = 'u32[]', space=smem, size = 0x4, offset = 0x4, fixed_abs, tag = 'smem constant byte address 0x4 - core index']
  #allocation1 [shape = 'u32[72,128]{1,0:T(1,128)}', space=vmem, size = 0x9000, scoped, tag = 'internal scratch']
  #allocation2 [shape = 'f32[16,128]{1,0:T(8,128)}', space=vmem, size = 0x2000, scoped, tag = 'scratch operand']
  %s0 = inlined_call_operand.vmem [shape: f32[16,128], index: 0, kind: input, shape index: {}]
  %s1 = inlined_call_operand.vmem [shape: f32[128,128], index: 1, kind: input, shape index: {}]
  %s2 = inlined_call_operand.vmem [shape: f32[1,128], index: 2, kind: input, shape index: {}]
  %s3 = inlined_call_operand.vmem [shape: f32[16,128], index: 3, kind: output, shape index: {}]
  %s4 = sld [smem:[#allocation0]]
  $region30: #{approximate_gelu.1} parent=0
    _
  %s6 = ssub.s32 1, %s4
  %s7 = scalar_select 0, %s6, %s4
  // Predicated region
  $region2: #{approximate_gelu.1} parent=0 // pred_check
    _
  $region3: #{approximate_gelu.1} parent=0 // pred_check_branch
    %9 = sbr.rel (0) target = $region5
  $region4: #{approximate_gelu.1} parent=0 // pred_region
    _
  $region5: #{approximate_gelu.1} parent=0 // pred_fallthru
    _
  // Predicated region
  $region6: #{approximate_gelu.1} parent=0 // pred_check
    _
  $region7: #{approximate_gelu.1} parent=0 // pred_check_branch
    %11 = sbr.rel (0) target = $region9
  $region8: #{approximate_gelu.1} parent=0 // pred_region
    _
  $region9: #{approximate_gelu.1} parent=0 // pred_fallthru
    _
  // Predicated region
  $region10: #{approximate_gelu.1} parent=0 // pred_check
    _
  $region11: #{approximate_gelu.1} parent=0 // pred_check_branch
    %13 = sbr.rel (0) target = $region13
  $region12: #{approximate_gelu.1} parent=0 // pred_region
    _
  $region13: #{approximate_gelu.1} parent=0 // pred_fallthru
    _
  %p14 = scmp.eq.s32.totalorder 0, 0
  // Predicated region
  $region14: #{approximate_gelu.1} parent=0 // pred_check
    %p15 = pneg %p14
  $region15: #{approximate_gelu.1} parent=0 // pred_check_branch
    %17 = sbr.rel (%p15) target = $region17
  $region16: #{approximate_gelu.1} parent=0 // pred_region
    %18 = vst [vmem:[#allocation2] sm:$0xff] 0.0
    %19 = vst [vmem:[#allocation2 + $0x8] sm:$0xff] 0.0
  $region17: #{approximate_gelu.1} parent=0 // pred_fallthru
    _
  %v20 = vld [vmem:[#allocation2] sm:$0xff]
  %v21 = vld [vmem:[#allocation2 + $0x8] sm:$0xff]
  %v22 = vld [vmem:[%s0] sm:$0xff]
  %v23 = vld [vmem:[%s0 + $0x8] sm:$0xff]
  %v24 = vld [vmem:[%s1] sm:$0xff]
  %v25 = vld [vmem:[%s1 + $0x8] sm:$0xff]
  %v26 = vld [vmem:[%s1 + $0x10] sm:$0xff]
  %v27 = vld [vmem:[%s1 + $0x18] sm:$0xff]
  %v28 = vld [vmem:[%s1 + $0x20] sm:$0xff]
  %v29 = vld [vmem:[%s1 + $0x28] sm:$0xff]
  %v30 = vld [vmem:[%s1 + $0x30] sm:$0xff]
  %v31 = vld [vmem:[%s1 + $0x38] sm:$0xff]
  %v32 = vld [vmem:[%s1 + $0x40] sm:$0xff]
  %v33 = vld [vmem:[%s1 + $0x48] sm:$0xff]
  %v34 = vld [vmem:[%s1 + $0x50] sm:$0xff]
  %v35 = vld [vmem:[%s1 + $0x58] sm:$0xff]
  %v36 = vld [vmem:[%s1 + $0x60] sm:$0xff]
  %v37 = vld [vmem:[%s1 + $0x68] sm:$0xff]
  %v38 = vld [vmem:[%s1 + $0x70] sm:$0xff]
  %v39 = vld [vmem:[%s1 + $0x78] sm:$0xff]
  %40 = vmatpush.msra.mxu0 %v39
  %41 = vmatpush.msra.mxu0 %v38
  %42 = vmatpush.msra.mxu0 %v37
  %43 = vmatpush.msra.mxu0 %v36
  %44 = vmatpush.msra.mxu0 %v35
  %45 = vmatpush.msra.mxu0 %v34
  %46 = vmatpush.msra.mxu0 %v33
  %47 = vmatpush.msra.mxu0 %v32
  %48 = vmatpush.msra.mxu0 %v31
  %49 = vmatpush.msra.mxu0 %v30
  %50 = vmatpush.msra.mxu0 %v29
  %51 = vmatpush.msra.mxu0 %v28
  %52 = vmatpush.msra.mxu0 %v27
  %53 = vmatpush.msra.mxu0 %v26
  %54 = vmatpush.msra.mxu0 %v25
  %55 = vmatpush.msra.mxu0 %v24
  %56 = vmatmul.f32.gmra.mxu0 %v22
  %v57 = vpop.f32.mrf.mxu0
  %v58 = vadd.f32 0.0, %v57
  %59 = vmatmul.f32.gmra.mxu0 %v23
  %v60 = vpop.f32.mrf.mxu0
  %v61 = vadd.f32 0.0, %v60
  %62 = vdwg.mxu0
  %v63 = vadd.f32 %v20, %v58
  %v64 = vadd.f32 %v21, %v61
  %65 = vst [vmem:[#allocation2] sm:$0xff] %v63
  %66 = vst [vmem:[#allocation2 + $0x8] sm:$0xff] %v64
  // Predicated region
  $region18: #{approximate_gelu.1} parent=0 // pred_check
    %p67 = pneg %p14
  $region19: #{approximate_gelu.1} parent=0 // pred_check_branch
    %69 = sbr.rel (%p67) target = $region21
  $region20: #{approximate_gelu.1} parent=0 // pred_region
    %v70 = vld [vmem:[#allocation2] sm:$0xff]
    %v71 = vld [vmem:[#allocation2 + $0x8] sm:$0xff]
    %v72 = vld [vmem:[%s2] sm:$0x1]
    %v74 = vperm.slane %v72, 0
    %v76 = vadd.f32 %v70, %v74
    %v77 = vadd.f32 %v71, %v74
    %v78 = vmul.f32 %v76, 1.702
    %v79 = vmul.f32 %v77, 1.702
    %v80 = vxor.u32 %v78, 2147483648
    %v81 = vxor.u32 %v79, 2147483648
    %v82 = vmul.f32 %v80, 1.442695
    %v83 = vpow.pop %v82
    %v84 = vmul.f32 %v81, 1.442695
    %v85 = vpow.pop %v84
    %v86 = vadd.f32 %v83, 1.0
    %v87 = vadd.f32 %v85, 1.0
    %v88 = vrcp.pop %v86
    %v89 = vmul.f32 %v86, %v88
    %v90 = vsub.f32 1.0, %v89
    %v91 = vmul.f32 %v88, %v90
    %v92 = vadd.f32 %v88, %v91
    %vm93 = vweird.f32 %v86
    %vm94 = vweird.f32 %v88
    %vm95 = vmor %vm93, %vm94
    %v96 = vsel %vm95, %v88, %v92
    %v97 = vand.u32 2147483647, %v86
    %vm98 = vcmp.eq.f32.partialorder %v97, 8.507059e+37
    %v99 = vand.u32 %v86, 2147483648
    %v100 = vor.u32 1.1754944e-38, %v99
    %v101 = vsel %vm98, %v100, %v96
    %v102 = vmul.f32 1.0, %v101
    %v103 = vrcp.pop %v87
    %v104 = vmul.f32 %v87, %v103
    %v105 = vsub.f32 1.0, %v104
    %v106 = vmul.f32 %v103, %v105
    %v107 = vadd.f32 %v103, %v106
    %vm108 = vweird.f32 %v87
    %vm109 = vweird.f32 %v103
    %vm110 = vmor %vm108, %vm109
    %v111 = vsel %vm110, %v103, %v107
    %v112 = vand.u32 2147483647, %v87
    %vm113 = vcmp.eq.f32.partialorder %v112, 8.507059e+37
    %v114 = vand.u32 %v87, 2147483648
    %v115 = vor.u32 1.1754944e-38, %v114
    %v116 = vsel %vm113, %v115, %v111
    %v117 = vmul.f32 1.0, %v116
    %v118 = vmul.f32 %v76, %v102
    %v119 = vmul.f32 %v77, %v117
    %120 = vst [vmem:[%s3] sm:$0xff] %v118
    %121 = vst [vmem:[%s3 + $0x8] sm:$0xff] %v119
  $region21: #{approximate_gelu.1} parent=0 // pred_fallthru
    _
  // Predicated region
  $region22: #{approximate_gelu.1} parent=0 // pred_check
    _
  $region23: #{approximate_gelu.1} parent=0 // pred_check_branch
    %123 = sbr.rel (0) target = $region25
  $region24: #{approximate_gelu.1} parent=0 // pred_region
    _
  $region25: #{approximate_gelu.1} parent=0 // pred_fallthru
    _
  // Predicated region
  $region26: #{approximate_gelu.1} parent=0 // pred_check
    _
  $region27: #{approximate_gelu.1} parent=0 // pred_check_branch
    %125 = sbr.rel (0) target = $region29
  $region28: #{approximate_gelu.1} parent=0 // pred_region
    _
  $region29: #{approximate_gelu.1} parent=0 // pred_fallthru
    _

</llo_original>
